<compile_context>
chip_gen: v7x
topology: tpu7x:2x2x1
jax: 0.10.0
libtpu: 0.0.40
codegen_flags: <defaults>
</compile_context>

<pallas_src>
import jax
import jax.numpy as jnp
from jax import lax
from jax.experimental import pallas as pl
from jax.experimental.pallas import tpu as pltpu

INPUT_SIZE = 2
HIDDEN = 128
OUT = 1
CHUNK = 128  # lanes per inner chunk -> (HIDDEN, CHUNK) f32 = 16 vregs


def _round_up(n, m):
    return ((n + m - 1) // m) * m


def critic_kernel(xT_ref, w1_ref, b1_ref, w2_ref, b2_ref, oT_ref):
    # xT_ref: (INPUT_SIZE, TILE_B)   batch on lanes
    # w1_ref: (HIDDEN, INPUT_SIZE)   == PyTorch fc1.weight layout
    # b1_ref: (HIDDEN, 1)
    # w2_ref: (OUT, HIDDEN)          == PyTorch fc2.weight layout
    # b2_ref: (OUT,) scalar in SMEM
    # oT_ref: (OUT, TILE_B)

    # Hoist lane/sublane broadcasts out of the chunk loop (JAX does not CSE
    # broadcast_in_dim, so re-materializing these per iteration would cost).
    w1_cols = [w1_ref[:, k:k + 1] for k in range(INPUT_SIZE)]   # (HIDDEN, 1) each
    b1 = b1_ref[...]                                            # (HIDDEN, 1)
    w2 = w2_ref[...]                                            # (1, HIDDEN)
    b2 = b2_ref[0]                                              # SMEM scalar

    tile_b = xT_ref.shape[1]
    n_chunks = tile_b // CHUNK

    def body(c, carry):
        start = pl.multiple_of(c * CHUNK, CHUNK)
        # fc1 (K=2) as VPU broadcast-FMA; all intermediates fit in vregs.
        acc = b1
        for k in range(INPUT_SIZE):                              # static unroll
            acc = acc + w1_cols[k] * xT_ref[k:k + 1, pl.ds(start, CHUNK)]
        hT = jnp.maximum(acc, 0.0)                               # (HIDDEN, CHUNK)
        # fc2 on the MXU: (1, HIDDEN) @ (HIDDEN, CHUNK) -> (1, CHUNK), f32 acc.
        o = jnp.dot(w2, hT, preferred_element_type=jnp.float32) + b2
        oT_ref[0:1, pl.ds(start, CHUNK)] = o.astype(oT_ref.dtype)
        return carry

    lax.fori_loop(0, n_chunks, body, 0, unroll=min(n_chunks, 8))


def critic_forward(x, fc1_w, fc1_b, fc2_w, fc2_b, *, tile_b=8192):
    """Forward pass of Critic: fc2(relu(fc1(x))).

    Params use PyTorch nn.Linear layout:
      fc1_w: (HIDDEN, INPUT_SIZE), fc1_b: (HIDDEN,)
      fc2_w: (OUT, HIDDEN),        fc2_b: (OUT,)
    Returns (B, OUT) float32.
    """
    B = x.shape[0]
    assert x.shape[1] == INPUT_SIZE

    B128 = _round_up(max(B, 1), CHUNK)
    tb = min(_round_up(tile_b, CHUNK), B128)
    # v7x has 2 TensorCores: prefer >= 2 grid steps so the "parallel" axis
    # actually splits the batch across cores whenever the batch allows it.
    if B128 >= 2 * CHUNK and tb >= B128:
        tb = _round_up(B128 // 2, CHUNK)
    B_pad = _round_up(B128, tb)
    num_tiles = B_pad // tb

    # Lane-dense transposed input (batch on lanes); pad + transpose fuse in XLA.
    xT = jnp.pad(x.astype(jnp.float32), ((0, B_pad - B), (0, 0))).T
    w1 = fc1_w.astype(jnp.float32).reshape(HIDDEN, INPUT_SIZE)
    b1 = fc1_b.astype(jnp.float32).reshape(HIDDEN, 1)
    w2 = fc2_w.astype(jnp.float32).reshape(OUT, HIDDEN)
    b2 = fc2_b.astype(jnp.float32).reshape(OUT)

    cost = pl.CostEstimate(
        flops=2 * B_pad * HIDDEN * (INPUT_SIZE + 1) + B_pad * HIDDEN,
        transcendentals=0,
        bytes_accessed=4 * (INPUT_SIZE * B_pad + B_pad
                            + HIDDEN * (INPUT_SIZE + 2) + OUT),
    )

    oT = pl.pallas_call(
        critic_kernel,
        out_shape=jax.ShapeDtypeStruct((OUT, B_pad), jnp.float32),
        grid=(num_tiles,),
        in_specs=[
            pl.BlockSpec((INPUT_SIZE, tb), lambda i: (0, i)),       # x^T tile
            pl.BlockSpec((HIDDEN, INPUT_SIZE), lambda i: (0, 0)),   # w1 resident
            pl.BlockSpec((HIDDEN, 1), lambda i: (0, 0)),            # b1 resident
            pl.BlockSpec((OUT, HIDDEN), lambda i: (0, 0)),          # w2 resident
            pl.BlockSpec(memory_space=pltpu.MemorySpace.SMEM),      # b2 scalar
        ],
        out_specs=pl.BlockSpec((OUT, tb), lambda i: (0, i)),
        compiler_params=pltpu.CompilerParams(
            dimension_semantics=("parallel",),
        ),
        cost_estimate=cost,
    )(xT, w1, b1, w2, b2)

    # Back to the PyTorch contract: (B, 1). Padded columns are sliced off.
    return oT[0, :B].reshape(B, OUT)


def init_params(key):
    # PyTorch nn.Linear default init: uniform(-1/sqrt(fan_in), 1/sqrt(fan_in)),
    # weights stored in PyTorch layout (out_features, in_features).
    k1, k2, k3, k4 = jax.random.split(key, 4)
    bound1 = 1.0 / jnp.sqrt(INPUT_SIZE)
    bound2 = 1.0 / jnp.sqrt(HIDDEN)
    fc1_w = jax.random.uniform(k1, (HIDDEN, INPUT_SIZE), jnp.float32, -bound1, bound1)
    fc1_b = jax.random.uniform(k2, (HIDDEN,), jnp.float32, -bound1, bound1)
    fc2_w = jax.random.uniform(k3, (OUT, HIDDEN), jnp.float32, -bound2, bound2)
    fc2_b = jax.random.uniform(k4, (OUT,), jnp.float32, -bound2, bound2)
    return fc1_w, fc1_b, fc2_w, fc2_b


if __name__ == "__main__":
    key = jax.random.PRNGKey(0)
    kx, kp, kx2 = jax.random.split(key, 3)

    fc1_w, fc1_b, fc2_w, fc2_b = init_params(kp)

    def ref_fn(xx):
        return jnp.maximum(xx @ fc1_w.T + fc1_b, 0.0) @ fc2_w.T + fc2_b

    # Small A2C-style batch (padded internally to one 128-lane tile).
    B_small = 8
    x_small = jax.random.normal(kx, (B_small, INPUT_SIZE), jnp.float32)
    out_small = jax.block_until_ready(
        critic_forward(x_small, fc1_w, fc1_b, fc2_w, fc2_b))
    assert out_small.shape == (B_small, OUT)
    assert jnp.allclose(out_small, ref_fn(x_small), atol=1e-5, rtol=1e-5)

    # Larger ragged batch: exercises padding, the multi-tile grid (>=2 steps
    # for v7x megacore), and the in-kernel chunk loop.
    B_big = 1000
    x_big = jax.random.normal(kx2, (B_big, INPUT_SIZE), jnp.float32)
    out_big = jax.block_until_ready(
        critic_forward(x_big, fc1_w, fc1_b, fc2_w, fc2_b))
    assert out_big.shape == (B_big, OUT)
    assert jnp.allclose(out_big, ref_fn(x_big), atol=1e-4, rtol=1e-4)

    print("KERNEL_OK")
</pallas_src>

<mosaic_0001>
module attributes {stable_mosaic.version = 11 : i64} {
  func.func @critic_kernel(%arg0: i32, %arg1: memref<2x128xf32, #tpu.memory_space<vmem>>, %arg2: memref<128x2xf32, #tpu.memory_space<vmem>>, %arg3: memref<128x1xf32, #tpu.memory_space<vmem>>, %arg4: memref<1x128xf32, #tpu.memory_space<vmem>>, %arg5: memref<1xf32, #tpu.memory_space<smem>>, %arg6: memref<1x128xf32, #tpu.memory_space<vmem>>) attributes {dimension_semantics = [#tpu.dimension_semantics<parallel>], iteration_bounds = array<i64: 1>, scalar_prefetch = 0 : i64, scratch_operands = 0 : i64, tpu.core_type = #tpu.core_type<tc>, window_params = [{transform_indices = @transform_0, window_bounds = array<i64: 2, 128>}, {pipeline_mode = #tpu.pipeline_mode<synchronous>, transform_indices = @transform_1, window_bounds = array<i64: 128, 2>}, {pipeline_mode = #tpu.pipeline_mode<synchronous>, transform_indices = @transform_2, window_bounds = array<i64: 128, 1>}, {pipeline_mode = #tpu.pipeline_mode<synchronous>, transform_indices = @transform_3, window_bounds = array<i64: 1, 128>}, {transform_indices = @transform_4, window_bounds = array<i64: 1>}, {transform_indices = @transform_5, window_bounds = array<i64: 1, 128>}]} {
    %c0 = arith.constant 0 : index
    %c0_0 = arith.constant 0 : index
    %0 = vector.load %arg2[%c0, %c0_0] : memref<128x2xf32, #tpu.memory_space<vmem>>, vector<128x1xf32>
    %c0_1 = arith.constant 0 : index
    %c1 = arith.constant 1 : index
    %1 = vector.load %arg2[%c0_1, %c1] : memref<128x2xf32, #tpu.memory_space<vmem>>, vector<128x1xf32>
    %c0_2 = arith.constant 0 : index
    %c0_3 = arith.constant 0 : index
    %2 = vector.load %arg3[%c0_2, %c0_3] : memref<128x1xf32, #tpu.memory_space<vmem>>, vector<128x1xf32>
    %c0_4 = arith.constant 0 : index
    %c0_5 = arith.constant 0 : index
    %3 = vector.load %arg4[%c0_4, %c0_5] : memref<1x128xf32, #tpu.memory_space<vmem>>, vector<1x128xf32>
    %c0_6 = arith.constant 0 : index
    %4 = memref.load %arg5[%c0_6] : memref<1xf32, #tpu.memory_space<smem>>
    %c0_i32 = arith.constant 0 : i32
    %c128_i32 = arith.constant 128 : i32
    %5 = arith.muli %c0_i32, %c128_i32 : i32
    %6 = tpu.assume_multiple %5, 128 : i32
    %c0_7 = arith.constant 0 : index
    %7 = arith.index_cast %6 : i32 to index
    %8 = vector.load %arg1[%c0_7, %7] : memref<2x128xf32, #tpu.memory_space<vmem>>, vector<1x128xf32>
    %9 = vector.broadcast %0 : vector<128x1xf32> to vector<128x128xf32>
    %10 = vector.broadcast %8 : vector<1x128xf32> to vector<128x128xf32>
    %11 = arith.mulf %9, %10 : vector<128x128xf32>
    %12 = vector.broadcast %2 : vector<128x1xf32> to vector<128x128xf32>
    %13 = arith.addf %12, %11 : vector<128x128xf32>
    %c1_8 = arith.constant 1 : index
    %14 = arith.index_cast %6 : i32 to index
    %15 = vector.load %arg1[%c1_8, %14] : memref<2x128xf32, #tpu.memory_space<vmem>>, vector<1x128xf32>
    %16 = vector.broadcast %1 : vector<128x1xf32> to vector<128x128xf32>
    %17 = vector.broadcast %15 : vector<1x128xf32> to vector<128x128xf32>
    %18 = arith.mulf %16, %17 : vector<128x128xf32>
    %19 = arith.addf %13, %18 : vector<128x128xf32>
    %cst = arith.constant 0.000000e+00 : f32
    %20 = vector.broadcast %cst : f32 to vector<128x128xf32>
    %21 = arith.maximumf %19, %20 : vector<128x128xf32>
    %cst_9 = arith.constant dense<0.000000e+00> : vector<1x128xf32>
    %22 = tpu.matmul %3, %21, %cst_9 {dimension_numbers = #tpu.dot_dimension_numbers<[1], [0], [0], [1], [0, 0, 1, 1], [], []>} : vector<1x128xf32>, vector<128x128xf32>, vector<1x128xf32> -> vector<1x128xf32>
    %23 = vector.broadcast %4 : f32 to vector<1x128xf32>
    %24 = arith.addf %22, %23 : vector<1x128xf32>
    %c0_10 = arith.constant 0 : index
    %25 = arith.index_cast %6 : i32 to index
    %26 = vector.load %arg6[%c0_10, %25] : memref<1x128xf32, #tpu.memory_space<vmem>>, vector<1x128xf32>
    tpu.vector_store %arg6[%c0_10, %25], %24 {strides = array<i32>} : memref<1x128xf32, #tpu.memory_space<vmem>>, vector<1x128xf32>,
    %c1_i32 = arith.constant 1 : i32
    return
  }
  func.func @transform_0(%arg0: i32) -> (i32, i32) {
    %c0_i32 = arith.constant 0 : i32
    %c0_i32_0 = arith.constant 0 : i32
    return %c0_i32, %arg0 : i32, i32
  }
  func.func @transform_1(%arg0: i32) -> (i32, i32) {
    %c0_i32 = arith.constant 0 : i32
    %c0_i32_0 = arith.constant 0 : i32
    %c0_i32_1 = arith.constant 0 : i32
    return %c0_i32, %c0_i32_0 : i32, i32
  }
  func.func @transform_2(%arg0: i32) -> (i32, i32) {
    %c0_i32 = arith.constant 0 : i32
    %c0_i32_0 = arith.constant 0 : i32
    %c0_i32_1 = arith.constant 0 : i32
    return %c0_i32, %c0_i32_0 : i32, i32
  }
  func.func @transform_3(%arg0: i32) -> (i32, i32) {
    %c0_i32 = arith.constant 0 : i32
    %c0_i32_0 = arith.constant 0 : i32
    %c0_i32_1 = arith.constant 0 : i32
    return %c0_i32, %c0_i32_0 : i32, i32
  }
  func.func @transform_4(%arg0: i32) -> i32 {
    %c0_i32 = arith.constant 0 : i32
    %c0_i32_0 = arith.constant 0 : i32
    return %c0_i32 : i32
  }
  func.func @transform_5(%arg0: i32) -> (i32, i32) {
    %c0_i32 = arith.constant 0 : i32
    %c0_i32_0 = arith.constant 0 : i32
    return %c0_i32, %arg0 : i32, i32
  }
}

</mosaic_0001>

<llo_original>
// kernel: tpu_custom_call.1
$region0: #{tpu_custom_call.1}
  #allocation0 [shape = 'u32[]', space=smem, size = 0x4, offset = 0x4, fixed_abs, tag = 'smem constant byte address 0x4 - core index']
  #allocation1 [shape = 'u32[144,128]{1,0:T(1,128)}', space=vmem, size = 0x12000, scoped, tag = 'internal scratch']
  #allocation2 [shape = 'f32[1]{0:T(128)S(6)}', space=smem, size = 0x200, scoped, tag = 'scoped memory for tpu_custom_call.1']
  %s0 = inlined_call_operand.vmem [shape: f32[2,128], index: 0, kind: input, shape index: {}]
  %s1 = inlined_call_operand.vmem [shape: f32[128,2], index: 1, kind: input, shape index: {}]
  %s2 = inlined_call_operand.vmem [shape: f32[128,1], index: 2, kind: input, shape index: {}]
  %s3 = inlined_call_operand.vmem [shape: f32[1,128], index: 3, kind: input, shape index: {}]
  %s4 = inlined_call_operand.<no memory space> [shape: f32[1], index: 4, kind: input, shape index: {}]
  %s5 = inlined_call_operand.hbm [shape: f32[1,128], index: 5, kind: output, shape index: {}]
  %s6 = sld [smem:[#allocation0]]
  $region30: #{tpu_custom_call.1} parent=0
    _
  %s8 = ssub.s32 1, %s6
  %s9 = scalar_select 0, %s8, %s6
  %10 = sst [smem:[#allocation2]] %s4
  $region1: #{tpu_custom_call.1} parent=0
    #allocation3 [shape = 'u8[512]{0}', space=vmem, size = 0x400, scoped, tag = 'output window, operand 0, single buffered']
    #allocation4 [shape = 's32[1]{0}', space=sflag, size = 0x4, scoped, tag = 'scoped memory for tpu_custom_call.1']
    %11 = vsyncpa [#allocation4], 0
    // Predicated region
    $region2: #{tpu_custom_call.1} parent=1 // pred_check
      _
    $region3: #{tpu_custom_call.1} parent=1 // pred_check_branch
      %13 = sbr.rel (0) target = $region5
    $region4: #{tpu_custom_call.1} parent=1 // pred_region
      _
    $region5: #{tpu_custom_call.1} parent=1 // pred_fallthru
      _
    // Predicated region
    $region6: #{tpu_custom_call.1} parent=1 // pred_check
      _
    $region7: #{tpu_custom_call.1} parent=1 // pred_check_branch
      %15 = sbr.rel (0) target = $region9
    $region8: #{tpu_custom_call.1} parent=1 // pred_region
      _
    $region9: #{tpu_custom_call.1} parent=1 // pred_fallthru
      _
    // Predicated region
    $region10: #{tpu_custom_call.1} parent=1 // pred_check
      _
    $region11: #{tpu_custom_call.1} parent=1 // pred_check_branch
      %17 = sbr.rel (0) target = $region13
    $region12: #{tpu_custom_call.1} parent=1 // pred_region
      _
    $region13: #{tpu_custom_call.1} parent=1 // pred_fallthru
      _
    // Predicated region
    $region14: #{tpu_custom_call.1} parent=1 // pred_check
      _
    $region15: #{tpu_custom_call.1} parent=1 // pred_check_branch
      %19 = sbr.rel (0) target = $region17
    $region16: #{tpu_custom_call.1} parent=1 // pred_region
      _
    $region17: #{tpu_custom_call.1} parent=1 // pred_fallthru
      _
    // Predicated region
    $region18: #{tpu_custom_call.1} parent=1 // pred_check
      _
    $region19: #{tpu_custom_call.1} parent=1 // pred_check_branch
      %21 = sbr.rel (0) target = $region21
    $region20: #{tpu_custom_call.1} parent=1 // pred_region
      _
    $region21: #{tpu_custom_call.1} parent=1 // pred_fallthru
      _
    %v22 = vld [vmem:[%s1] sm:$0xff]
    %v23 = vld [vmem:[%s1 + $0x8] sm:$0xff]
    %v24 = vld [vmem:[%s1 + $0x10] sm:$0xff]
    %v25 = vld [vmem:[%s1 + $0x18] sm:$0xff]
    %v26 = vld [vmem:[%s1 + $0x20] sm:$0xff]
    %v27 = vld [vmem:[%s1 + $0x28] sm:$0xff]
    %v28 = vld [vmem:[%s1 + $0x30] sm:$0xff]
    %v29 = vld [vmem:[%s1 + $0x38] sm:$0xff]
    %v30 = vld [vmem:[%s1 + $0x40] sm:$0xff]
    %v31 = vld [vmem:[%s1 + $0x48] sm:$0xff]
    %v32 = vld [vmem:[%s1 + $0x50] sm:$0xff]
    %v33 = vld [vmem:[%s1 + $0x58] sm:$0xff]
    %v34 = vld [vmem:[%s1 + $0x60] sm:$0xff]
    %v35 = vld [vmem:[%s1 + $0x68] sm:$0xff]
    %v36 = vld [vmem:[%s1 + $0x70] sm:$0xff]
    %v37 = vld [vmem:[%s1 + $0x78] sm:$0xff]
    %v38 = vld [vmem:[%s2] sm:$0xff]
    %v39 = vld [vmem:[%s2 + $0x8] sm:$0xff]
    %v40 = vld [vmem:[%s2 + $0x10] sm:$0xff]
    %v41 = vld [vmem:[%s2 + $0x18] sm:$0xff]
    %v42 = vld [vmem:[%s2 + $0x20] sm:$0xff]
    %v43 = vld [vmem:[%s2 + $0x28] sm:$0xff]
    %v44 = vld [vmem:[%s2 + $0x30] sm:$0xff]
    %v45 = vld [vmem:[%s2 + $0x38] sm:$0xff]
    %v46 = vld [vmem:[%s2 + $0x40] sm:$0xff]
    %v47 = vld [vmem:[%s2 + $0x48] sm:$0xff]
    %v48 = vld [vmem:[%s2 + $0x50] sm:$0xff]
    %v49 = vld [vmem:[%s2 + $0x58] sm:$0xff]
    %v50 = vld [vmem:[%s2 + $0x60] sm:$0xff]
    %v51 = vld [vmem:[%s2 + $0x68] sm:$0xff]
    %v52 = vld [vmem:[%s2 + $0x70] sm:$0xff]
    %v53 = vld [vmem:[%s2 + $0x78] sm:$0xff]
    %v54 = vld [vmem:[%s3] sm:$0x1]
    %s55 = sld [smem:[#allocation2]]
    %v56 = vld [vmem:[%s0] sm:$0x1]
    %58 = vset.pattern.permute.xlu0 0
    %59 = vperm.xlu0 %58, %v22
    %v60 = vpop.permute.xlu0 %59
    %63 = vset.pattern.permute.xlu0 0
    %64 = vperm.xlu0 %63, %v23
    %v65 = vpop.permute.xlu0 %64
    %68 = vset.pattern.permute.xlu0 0
    %69 = vperm.xlu0 %68, %v24
    %v70 = vpop.permute.xlu0 %69
    %73 = vset.pattern.permute.xlu0 0
    %74 = vperm.xlu0 %73, %v25
    %v75 = vpop.permute.xlu0 %74
    %78 = vset.pattern.permute.xlu0 0
    %79 = vperm.xlu0 %78, %v26
    %v80 = vpop.permute.xlu0 %79
    %83 = vset.pattern.permute.xlu0 0
    %84 = vperm.xlu0 %83, %v27
    %v85 = vpop.permute.xlu0 %84
    %88 = vset.pattern.permute.xlu0 0
    %89 = vperm.xlu0 %88, %v28
    %v90 = vpop.permute.xlu0 %89
    %93 = vset.pattern.permute.xlu0 0
    %94 = vperm.xlu0 %93, %v29
    %v95 = vpop.permute.xlu0 %94
    %98 = vset.pattern.permute.xlu0 0
    %99 = vperm.xlu0 %98, %v30
    %v100 = vpop.permute.xlu0 %99
    %103 = vset.pattern.permute.xlu0 0
    %104 = vperm.xlu0 %103, %v31
    %v105 = vpop.permute.xlu0 %104
    %108 = vset.pattern.permute.xlu0 0
    %109 = vperm.xlu0 %108, %v32
    %v110 = vpop.permute.xlu0 %109
    %113 = vset.pattern.permute.xlu0 0
    %114 = vperm.xlu0 %113, %v33
    %v115 = vpop.permute.xlu0 %114
    %118 = vset.pattern.permute.xlu0 0
    %119 = vperm.xlu0 %118, %v34
    %v120 = vpop.permute.xlu0 %119
    %123 = vset.pattern.permute.xlu0 0
    %124 = vperm.xlu0 %123, %v35
    %v125 = vpop.permute.xlu0 %124
    %128 = vset.pattern.permute.xlu0 0
    %129 = vperm.xlu0 %128, %v36
    %v130 = vpop.permute.xlu0 %129
    %133 = vset.pattern.permute.xlu0 0
    %134 = vperm.xlu0 %133, %v37
    %v135 = vpop.permute.xlu0 %134
    %v137 = vlaneseq
    %v138 = vshrl.u32 %v137, 7
    %v139 = vsub.s32 0, %v138
    %v140 = vrot.slane %v56, %v139
    %v141 = vmul.f32 %v60, %v140
    %v142 = vmul.f32 %v65, %v140
    %v143 = vmul.f32 %v70, %v140
    %v144 = vmul.f32 %v75, %v140
    %v145 = vmul.f32 %v80, %v140
    %v146 = vmul.f32 %v85, %v140
    %v147 = vmul.f32 %v90, %v140
    %v148 = vmul.f32 %v95, %v140
    %v149 = vmul.f32 %v100, %v140
    %v150 = vmul.f32 %v105, %v140
    %v151 = vmul.f32 %v110, %v140
    %v152 = vmul.f32 %v115, %v140
    %v153 = vmul.f32 %v120, %v140
    %v154 = vmul.f32 %v125, %v140
    %v155 = vmul.f32 %v130, %v140
    %v156 = vmul.f32 %v135, %v140
    %158 = vset.pattern.permute.xlu0 0
    %159 = vperm.xlu0 %158, %v38
    %v160 = vpop.permute.xlu0 %159
    %163 = vset.pattern.permute.xlu0 0
    %164 = vperm.xlu0 %163, %v39
    %v165 = vpop.permute.xlu0 %164
    %168 = vset.pattern.permute.xlu0 0
    %169 = vperm.xlu0 %168, %v40
    %v170 = vpop.permute.xlu0 %169
    %173 = vset.pattern.permute.xlu0 0
    %174 = vperm.xlu0 %173, %v41
    %v175 = vpop.permute.xlu0 %174
    %178 = vset.pattern.permute.xlu0 0
    %179 = vperm.xlu0 %178, %v42
    %v180 = vpop.permute.xlu0 %179
    %183 = vset.pattern.permute.xlu0 0
    %184 = vperm.xlu0 %183, %v43
    %v185 = vpop.permute.xlu0 %184
    %188 = vset.pattern.permute.xlu0 0
    %189 = vperm.xlu0 %188, %v44
    %v190 = vpop.permute.xlu0 %189
    %193 = vset.pattern.permute.xlu0 0
    %194 = vperm.xlu0 %193, %v45
    %v195 = vpop.permute.xlu0 %194
    %198 = vset.pattern.permute.xlu0 0
    %199 = vperm.xlu0 %198, %v46
    %v200 = vpop.permute.xlu0 %199
    %203 = vset.pattern.permute.xlu0 0
    %204 = vperm.xlu0 %203, %v47
    %v205 = vpop.permute.xlu0 %204
    %208 = vset.pattern.permute.xlu0 0
    %209 = vperm.xlu0 %208, %v48
    %v210 = vpop.permute.xlu0 %209
    %213 = vset.pattern.permute.xlu0 0
    %214 = vperm.xlu0 %213, %v49
    %v215 = vpop.permute.xlu0 %214
    %218 = vset.pattern.permute.xlu0 0
    %219 = vperm.xlu0 %218, %v50
    %v220 = vpop.permute.xlu0 %219
    %223 = vset.pattern.permute.xlu0 0
    %224 = vperm.xlu0 %223, %v51
    %v225 = vpop.permute.xlu0 %224
    %228 = vset.pattern.permute.xlu0 0
    %229 = vperm.xlu0 %228, %v52
    %v230 = vpop.permute.xlu0 %229
    %233 = vset.pattern.permute.xlu0 0
    %234 = vperm.xlu0 %233, %v53
    %v235 = vpop.permute.xlu0 %234
    %v237 = vadd.f32 %v160, %v141
    %v238 = vadd.f32 %v165, %v142
    %v239 = vadd.f32 %v170, %v143
    %v240 = vadd.f32 %v175, %v144
    %v241 = vadd.f32 %v180, %v145
    %v242 = vadd.f32 %v185, %v146
    %v243 = vadd.f32 %v190, %v147
    %v244 = vadd.f32 %v195, %v148
    %v245 = vadd.f32 %v200, %v149
    %v246 = vadd.f32 %v205, %v150
    %v247 = vadd.f32 %v210, %v151
    %v248 = vadd.f32 %v215, %v152
    %v249 = vadd.f32 %v220, %v153
    %v250 = vadd.f32 %v225, %v154
    %v251 = vadd.f32 %v230, %v155
    %v252 = vadd.f32 %v235, %v156
    %v253 = vld [vmem:[%s0 + $0x1] sm:$0x1]
    %254 = vset.pattern.permute.xlu0 1
    %255 = vperm.xlu0 %254, %v22
    %v256 = vpop.permute.xlu0 %255
    %258 = vset.pattern.permute.xlu0 1
    %259 = vperm.xlu0 %258, %v23
    %v260 = vpop.permute.xlu0 %259
    %262 = vset.pattern.permute.xlu0 1
    %263 = vperm.xlu0 %262, %v24
    %v264 = vpop.permute.xlu0 %263
    %266 = vset.pattern.permute.xlu0 1
    %267 = vperm.xlu0 %266, %v25
    %v268 = vpop.permute.xlu0 %267
    %270 = vset.pattern.permute.xlu0 1
    %271 = vperm.xlu0 %270, %v26
    %v272 = vpop.permute.xlu0 %271
    %274 = vset.pattern.permute.xlu0 1
    %275 = vperm.xlu0 %274, %v27
    %v276 = vpop.permute.xlu0 %275
    %278 = vset.pattern.permute.xlu0 1
    %279 = vperm.xlu0 %278, %v28
    %v280 = vpop.permute.xlu0 %279
    %282 = vset.pattern.permute.xlu0 1
    %283 = vperm.xlu0 %282, %v29
    %v284 = vpop.permute.xlu0 %283
    %286 = vset.pattern.permute.xlu0 1
    %287 = vperm.xlu0 %286, %v30
    %v288 = vpop.permute.xlu0 %287
    %290 = vset.pattern.permute.xlu0 1
    %291 = vperm.xlu0 %290, %v31
    %v292 = vpop.permute.xlu0 %291
    %294 = vset.pattern.permute.xlu0 1
    %295 = vperm.xlu0 %294, %v32
    %v296 = vpop.permute.xlu0 %295
    %298 = vset.pattern.permute.xlu0 1
    %299 = vperm.xlu0 %298, %v33
    %v300 = vpop.permute.xlu0 %299
    %302 = vset.pattern.permute.xlu0 1
    %303 = vperm.xlu0 %302, %v34
    %v304 = vpop.permute.xlu0 %303
    %306 = vset.pattern.permute.xlu0 1
    %307 = vperm.xlu0 %306, %v35
    %v308 = vpop.permute.xlu0 %307
    %310 = vset.pattern.permute.xlu0 1
    %311 = vperm.xlu0 %310, %v36
    %v312 = vpop.permute.xlu0 %311
    %314 = vset.pattern.permute.xlu0 1
    %315 = vperm.xlu0 %314, %v37
    %v316 = vpop.permute.xlu0 %315
    %v318 = vlaneseq
    %v319 = vshrl.u32 %v318, 7
    %v320 = vsub.s32 0, %v319
    %v321 = vrot.slane %v253, %v320
    %v322 = vmul.f32 %v256, %v321
    %v323 = vmul.f32 %v260, %v321
    %v324 = vmul.f32 %v264, %v321
    %v325 = vmul.f32 %v268, %v321
    %v326 = vmul.f32 %v272, %v321
    %v327 = vmul.f32 %v276, %v321
    %v328 = vmul.f32 %v280, %v321
    %v329 = vmul.f32 %v284, %v321
    %v330 = vmul.f32 %v288, %v321
    %v331 = vmul.f32 %v292, %v321
    %v332 = vmul.f32 %v296, %v321
    %v333 = vmul.f32 %v300, %v321
    %v334 = vmul.f32 %v304, %v321
    %v335 = vmul.f32 %v308, %v321
    %v336 = vmul.f32 %v312, %v321
    %v337 = vmul.f32 %v316, %v321
    %v338 = vadd.f32 %v237, %v322
    %v339 = vadd.f32 %v238, %v323
    %v340 = vadd.f32 %v239, %v324
    %v341 = vadd.f32 %v240, %v325
    %v342 = vadd.f32 %v241, %v326
    %v343 = vadd.f32 %v242, %v327
    %v344 = vadd.f32 %v243, %v328
    %v345 = vadd.f32 %v244, %v329
    %v346 = vadd.f32 %v245, %v330
    %v347 = vadd.f32 %v246, %v331
    %v348 = vadd.f32 %v247, %v332
    %v349 = vadd.f32 %v248, %v333
    %v350 = vadd.f32 %v249, %v334
    %v351 = vadd.f32 %v250, %v335
    %v352 = vadd.f32 %v251, %v336
    %v353 = vadd.f32 %v252, %v337
    %v354 = vmax.f32 %v338, 0.0
    %v355 = vmax.f32 %v339, 0.0
    %v356 = vmax.f32 %v340, 0.0
    %v357 = vmax.f32 %v341, 0.0
    %v358 = vmax.f32 %v342, 0.0
    %v359 = vmax.f32 %v343, 0.0
    %v360 = vmax.f32 %v344, 0.0
    %v361 = vmax.f32 %v345, 0.0
    %v362 = vmax.f32 %v346, 0.0
    %v363 = vmax.f32 %v347, 0.0
    %v364 = vmax.f32 %v348, 0.0
    %v365 = vmax.f32 %v349, 0.0
    %v366 = vmax.f32 %v350, 0.0
    %v367 = vmax.f32 %v351, 0.0
    %v368 = vmax.f32 %v352, 0.0
    %v369 = vmax.f32 %v353, 0.0
    %v370 = vstv %s55
    %371 = vmatprep.subr.mxu0 0.0
    %372 = vmatpush1.msra.mxu0 %v354
    %373 = vmatprep.subr.mxu0 0.0
    %374 = vmatpush1.msra.mxu0 %v355
    %375 = vmatprep.subr.mxu0 0.0
    %376 = vmatpush1.msra.mxu0 %v356
    %377 = vmatprep.subr.mxu0 0.0
    %378 = vmatpush1.msra.mxu0 %v357
    %379 = vmatprep.subr.mxu0 0.0
    %380 = vmatpush1.msra.mxu0 %v358
    %381 = vmatprep.subr.mxu0 0.0
    %382 = vmatpush1.msra.mxu0 %v359
    %383 = vmatprep.subr.mxu0 0.0
    %384 = vmatpush1.msra.mxu0 %v360
    %385 = vmatprep.subr.mxu0 0.0
    %386 = vmatpush1.msra.mxu0 %v361
    %387 = vmatprep.subr.mxu0 0.0
    %388 = vmatpush1.msra.mxu0 %v362
    %389 = vmatprep.subr.mxu0 0.0
    %390 = vmatpush1.msra.mxu0 %v363
    %391 = vmatprep.subr.mxu0 0.0
    %392 = vmatpush1.msra.mxu0 %v364
    %393 = vmatprep.subr.mxu0 0.0
    %394 = vmatpush1.msra.mxu0 %v365
    %395 = vmatprep.subr.mxu0 0.0
    %396 = vmatpush1.msra.mxu0 %v366
    %397 = vmatprep.subr.mxu0 0.0
    %398 = vmatpush1.msra.mxu0 %v367
    %399 = vmatprep.subr.mxu0 0.0
    %400 = vmatpush1.msra.mxu0 %v368
    %401 = vmatprep.subr.mxu0 0.0
    %402 = vmatpush1.msra.mxu0 %v369
    %403 = vmatprep.subr.mxu0 0.0
    %404 = vmatpush1.msra.mxu0 0.0
    %405 = vmatprep.subr.mxu0 0.0
    %406 = vmatpush1.msra.mxu0 0.0
    %407 = vmatprep.subr.mxu0 0.0
    %408 = vmatpush1.msra.mxu0 0.0
    %409 = vmatprep.subr.mxu0 0.0
    %410 = vmatpush1.msra.mxu0 0.0
    %411 = vmatprep.subr.mxu0 0.0
    %412 = vmatpush1.msra.mxu0 0.0
    %413 = vmatprep.subr.mxu0 0.0
    %414 = vmatpush1.msra.mxu0 0.0
    %415 = vmatprep.subr.mxu0 0.0
    %416 = vmatpush1.msra.mxu0 0.0
    %417 = vmatprep.subr.mxu0 0.0
    %418 = vmatpush1.msra.mxu0 0.0
    %419 = vmatprep.subr.mxu0 0.0
    %420 = vmatpush1.msra.mxu0 0.0
    %421 = vmatprep.subr.mxu0 0.0
    %422 = vmatpush1.msra.mxu0 0.0
    %423 = vmatprep.subr.mxu0 0.0
    %424 = vmatpush1.msra.mxu0 0.0
    %425 = vmatprep.subr.mxu0 0.0
    %426 = vmatpush1.msra.mxu0 0.0
    %427 = vmatprep.subr.mxu0 0.0
    %428 = vmatpush1.msra.mxu0 0.0
    %429 = vmatprep.subr.mxu0 0.0
    %430 = vmatpush1.msra.mxu0 0.0
    %431 = vmatprep.subr.mxu0 0.0
    %432 = vmatpush1.msra.mxu0 0.0
    %433 = vmatprep.subr.mxu0 0.0
    %434 = vmatpush1.msra.mxu0 0.0
    %435 = vmatprep.mubr.f32.mxu0 0.0
    %436 = vmatmul.mubr.f32.gmra.mrb[0].mxu0 %v54
    %v437 = vpop.f32.mrb[0].mxu0
    %v438 = vadd.f32 %v370, %v437
    %v439 = vpop.f32.mrb[0].mxu0
    %440 = vdwg.mxu0
    %441 = vst [vmem:[#allocation3] sm:$0x1] %v438
    // Predicated region
    $region22: #{tpu_custom_call.1} parent=1 // pred_check
      _
    $region23: #{tpu_custom_call.1} parent=1 // pred_check_branch
      %443 = sbr.rel (0) target = $region25
    $region24: #{tpu_custom_call.1} parent=1 // pred_region
      %s445 = ssub.s32 16, 16
      %446 = vsyncadd [#allocation4], %s445
      %s448 = sshll.u32 [#allocation3], 4
      %s449 = int_to_ptr.vmem [resolvable:$true] %s448
      %451 = dma.vmem_to_hbm [thread:$0]  %s449, 16, %s5, [#allocation4]
    $region25: #{tpu_custom_call.1} parent=1 // pred_fallthru
      _
    // Predicated region
    $region26: #{tpu_custom_call.1} parent=1 // pred_check
      _
    $region27: #{tpu_custom_call.1} parent=1 // pred_check_branch
      %453 = sbr.rel (0) target = $region29
    $region28: #{tpu_custom_call.1} parent=1 // pred_region
      %454 = dma.done [#allocation4], 16
    $region29: #{tpu_custom_call.1} parent=1 // pred_fallthru
      _
    %455 = vsyncpa [#allocation4], 1

</llo_original>
